<compile_context>
chip_gen: v7x
topology: tpu7x:2x2x1
jax: 0.10.0
libtpu: 0.0.40
codegen_flags: <defaults>
</compile_context>

<pallas_src>
import jax
import jax.numpy as jnp
from jax.experimental import pallas as pl
from jax.experimental.pallas import tpu as pltpu

IN_FEATURES = 64 * 64 * 2      # 8192, fixed by the module's fc1
HALF = 64 * 64                 # 4096 elements per half (A or B)
ROWS, LANES = 32, 128          # lane-dense layout of each 4096-element half


def linear_sigmoid_kernel(a_ref, b_ref, w_ref, bias_ref, o_ref):
    # a_ref, b_ref : (32, 128) f32 VMEM — lane-dense views of A.view(-1), B.view(-1)
    # w_ref        : (64, 128) f32 VMEM — fc1 weight packed as [w_a (32,128); w_b (32,128)]
    # bias_ref     : (1,) f32 SMEM
    # o_ref        : (1, 1) f32 VMEM
    w_a = w_ref[:ROWS, :]                                   # static views — no copy
    w_b = w_ref[ROWS:, :]
    # Fused "concat": both halves multiply-accumulated together on the VPU.
    partial = a_ref[...] * w_a + b_ref[...] * w_b           # (32, 128)
    col = jnp.sum(partial, axis=0, keepdims=True)           # (1, 128)  sublane reduce (VALU)
    acc = jnp.sum(col, axis=1, keepdims=True)               # (1, 1)    one cross-lane reduce (XLU)
    o_ref[...] = jax.nn.sigmoid(acc + bias_ref[0]).astype(o_ref.dtype)   # exp on EUP


@jax.jit
def simple_nn_forward(A, B, w_packed, bias):
    """Matches PyTorch: sigmoid(fc1(concat(A.view(-1), B.view(-1)))) -> shape (1,).

    w_packed is the fc1 weight (8192,) reshaped ONCE at init to (64, 128): rows 0..31 hold the
    coefficients for A's half, rows 32..63 for B's half, in row-major (view(-1)) order, so
      sum(A2 * w_packed[:32]) + sum(B2 * w_packed[32:]) == dot(concat(A.flat, B.flat), w).
    """
    # Zero-copy, row-major lane-dense reshapes (flattening order preserved).
    a2 = A.reshape(ROWS, LANES)
    b2 = B.reshape(ROWS, LANES)
    out = pl.pallas_call(
        linear_sigmoid_kernel,
        out_shape=jax.ShapeDtypeStruct((1, 1), jnp.float32),
        in_specs=[
            pl.BlockSpec(memory_space=pltpu.MemorySpace.VMEM),   # A  (32, 128)
            pl.BlockSpec(memory_space=pltpu.MemorySpace.VMEM),   # B  (32, 128)
            pl.BlockSpec(memory_space=pltpu.MemorySpace.VMEM),   # w  (64, 128)
            pl.BlockSpec(memory_space=pltpu.MemorySpace.SMEM),   # bias (1,)
        ],
        out_specs=pl.BlockSpec(memory_space=pltpu.MemorySpace.VMEM),
    )(a2, b2, w_packed, bias)
    return out.reshape(1)   # PyTorch returns shape (1,)


if __name__ == "__main__":
    key = jax.random.PRNGKey(0)
    k_a, k_b, k_w, k_bias = jax.random.split(key, 4)

    # Inputs: A and B jointly flatten to 8192 elements (fc1 in_features).
    A = jax.random.normal(k_a, (64, 64), dtype=jnp.float32)
    B = jax.random.normal(k_b, (64, 64), dtype=jnp.float32)

    # Deterministic parameter init mirroring nn.Linear's U(-1/sqrt(fan_in), 1/sqrt(fan_in)).
    bound = 1.0 / jnp.sqrt(jnp.float32(IN_FEATURES))
    w = jax.random.uniform(k_w, (IN_FEATURES,), minval=-bound, maxval=bound,
                           dtype=jnp.float32)          # fc1 weight, (1, 8192) flattened
    bias = jax.random.uniform(k_bias, (1,), minval=-bound, maxval=bound,
                              dtype=jnp.float32)

    # Weight prep done ONCE (hoisted out of the per-call path). A single row-major reshape of
    # the 8192-vector to (64, 128) is exactly [w[:4096].reshape(32,128); w[4096:].reshape(32,128)].
    w_packed = jax.block_until_ready(w.reshape(2 * ROWS, LANES))

    out = simple_nn_forward(A, B, w_packed, bias)
    out = jax.block_until_ready(out)

    # Pure-JAX reference for sanity (mirrors the PyTorch module exactly).
    x_flat = jnp.concatenate([A.reshape(-1), B.reshape(-1)], axis=0)
    ref = jax.nn.sigmoid(jnp.dot(x_flat, w) + bias)
    assert out.shape == (1,)
    assert jnp.allclose(out, ref, atol=1e-5, rtol=1e-5), (out, ref)

    print("KERNEL_OK")
</pallas_src>

<mosaic_0001>
module attributes {stable_mosaic.version = 11 : i64} {
  func.func @linear_sigmoid_kernel(%arg0: memref<32x128xf32, #tpu.memory_space<vmem>>, %arg1: memref<32x128xf32, #tpu.memory_space<vmem>>, %arg2: memref<64x128xf32, #tpu.memory_space<vmem>>, %arg3: memref<1xf32, #tpu.memory_space<smem>>, %arg4: memref<1x1xf32, #tpu.memory_space<vmem>>) attributes {dimension_semantics = [], scalar_prefetch = 0 : i64, scratch_operands = 0 : i64, tpu.core_type = #tpu.core_type<tc>} {
    %c0 = arith.constant 0 : index
    %c0_0 = arith.constant 0 : index
    %0 = vector.load %arg2[%c0, %c0_0] : memref<64x128xf32, #tpu.memory_space<vmem>>, vector<32x128xf32>
    %c32 = arith.constant 32 : index
    %c0_1 = arith.constant 0 : index
    %1 = vector.load %arg2[%c32, %c0_1] : memref<64x128xf32, #tpu.memory_space<vmem>>, vector<32x128xf32>
    %c0_2 = arith.constant 0 : index
    %c0_3 = arith.constant 0 : index
    %2 = vector.load %arg0[%c0_2, %c0_3] : memref<32x128xf32, #tpu.memory_space<vmem>>, vector<32x128xf32>
    %3 = arith.mulf %2, %0 : vector<32x128xf32>
    %c0_4 = arith.constant 0 : index
    %c0_5 = arith.constant 0 : index
    %4 = vector.load %arg1[%c0_4, %c0_5] : memref<32x128xf32, #tpu.memory_space<vmem>>, vector<32x128xf32>
    %5 = arith.mulf %4, %1 : vector<32x128xf32>
    %6 = arith.addf %3, %5 : vector<32x128xf32>
    %cst = arith.constant dense<0.000000e+00> : vector<128xf32>
    %7 = vector.multi_reduction <add>, %6, %cst [0] : vector<32x128xf32> to vector<128xf32>
    %8 = vector.shape_cast %7 : vector<128xf32> to vector<1x128xf32>
    %cst_6 = arith.constant dense<0.000000e+00> : vector<1xf32>
    %9 = vector.multi_reduction <add>, %8, %cst_6 [1] : vector<1x128xf32> to vector<1xf32>
    %10 = vector.shape_cast %9 : vector<1xf32> to vector<1x1xf32>
    %c0_7 = arith.constant 0 : index
    %11 = memref.load %arg3[%c0_7] : memref<1xf32, #tpu.memory_space<smem>>
    %12 = vector.broadcast %11 : f32 to vector<1x1xf32>
    %13 = arith.addf %10, %12 : vector<1x1xf32>
    %14 = arith.negf %13 : vector<1x1xf32>
    %15 = math.exp %14 : vector<1x1xf32>
    %cst_8 = arith.constant 1.000000e+00 : f32
    %16 = vector.broadcast %cst_8 : f32 to vector<1x1xf32>
    %17 = arith.addf %16, %15 : vector<1x1xf32>
    %18 = arith.divf %16, %17 : vector<1x1xf32>
    %c0_9 = arith.constant 0 : index
    %c0_10 = arith.constant 0 : index
    %19 = vector.load %arg4[%c0_9, %c0_10] : memref<1x1xf32, #tpu.memory_space<vmem>>, vector<1x1xf32>
    tpu.vector_store %arg4[%c0_9, %c0_10], %18 {strides = array<i32>} : memref<1x1xf32, #tpu.memory_space<vmem>>, vector<1x1xf32>,
    return
  }
}

</mosaic_0001>

<llo_original>
// kernel: simple_nn_forward.1
$region0: #{simple_nn_forward.1}
  #allocation0 [shape = 'u32[]', space=smem, size = 0x4, offset = 0x4, fixed_abs, tag = 'smem constant byte address 0x4 - core index']
  #allocation1 [shape = 'u32[144,128]{1,0:T(1,128)}', space=vmem, size = 0x12000, scoped, tag = 'internal scratch']
  #allocation2 [shape = 'f32[1]{0:T(128)S(6)}', space=smem, size = 0x200, scoped, tag = 'scoped memory for simple_nn_forward.1']
  %s0 = inlined_call_operand.vmem [shape: f32[32,128], index: 0, kind: input, shape index: {}]
  %s1 = inlined_call_operand.vmem [shape: f32[32,128], index: 1, kind: input, shape index: {}]
  %s2 = inlined_call_operand.vmem [shape: f32[64,128], index: 2, kind: input, shape index: {}]
  %s3 = inlined_call_operand.<no memory space> [shape: f32[1], index: 3, kind: input, shape index: {}]
  %s4 = inlined_call_operand.hbm [shape: f32[1,1], index: 4, kind: output, shape index: {}]
  %s5 = sld [smem:[#allocation0]]
  $region26: #{simple_nn_forward.1} parent=0
    _
  %s7 = ssub.s32 1, %s5
  %s8 = scalar_select 0, %s7, %s5
  %9 = sst [smem:[#allocation2]] %s3
  $region1: #{simple_nn_forward.1} parent=0
    #allocation3 [shape = 'u8[512]{0}', space=vmem, size = 0x400, scoped, tag = 'output window, operand 0, single buffered']
    #allocation4 [shape = 's32[1]{0}', space=sflag, size = 0x4, scoped, tag = 'scoped memory for simple_nn_forward.1']
    %10 = vsyncpa [#allocation4], 0
    // Predicated region
    $region2: #{simple_nn_forward.1} parent=1 // pred_check
      _
    $region3: #{simple_nn_forward.1} parent=1 // pred_check_branch
      %12 = sbr.rel (0) target = $region5
    $region4: #{simple_nn_forward.1} parent=1 // pred_region
      _
    $region5: #{simple_nn_forward.1} parent=1 // pred_fallthru
      _
    // Predicated region
    $region6: #{simple_nn_forward.1} parent=1 // pred_check
      _
    $region7: #{simple_nn_forward.1} parent=1 // pred_check_branch
      %14 = sbr.rel (0) target = $region9
    $region8: #{simple_nn_forward.1} parent=1 // pred_region
      _
    $region9: #{simple_nn_forward.1} parent=1 // pred_fallthru
      _
    // Predicated region
    $region10: #{simple_nn_forward.1} parent=1 // pred_check
      _
    $region11: #{simple_nn_forward.1} parent=1 // pred_check_branch
      %16 = sbr.rel (0) target = $region13
    $region12: #{simple_nn_forward.1} parent=1 // pred_region
      _
    $region13: #{simple_nn_forward.1} parent=1 // pred_fallthru
      _
    // Predicated region
    $region14: #{simple_nn_forward.1} parent=1 // pred_check
      _
    $region15: #{simple_nn_forward.1} parent=1 // pred_check_branch
      %18 = sbr.rel (0) target = $region17
    $region16: #{simple_nn_forward.1} parent=1 // pred_region
      _
    $region17: #{simple_nn_forward.1} parent=1 // pred_fallthru
      _
    %v19 = vld [vmem:[%s2] sm:$0xff]
    %v20 = vld [vmem:[%s2 + $0x8] sm:$0xff]
    %v21 = vld [vmem:[%s2 + $0x10] sm:$0xff]
    %v22 = vld [vmem:[%s2 + $0x18] sm:$0xff]
    %v23 = vld [vmem:[%s2 + $0x20] sm:$0xff]
    %v24 = vld [vmem:[%s2 + $0x28] sm:$0xff]
    %v25 = vld [vmem:[%s2 + $0x30] sm:$0xff]
    %v26 = vld [vmem:[%s2 + $0x38] sm:$0xff]
    %v27 = vld [vmem:[%s0] sm:$0xff]
    %v28 = vld [vmem:[%s0 + $0x8] sm:$0xff]
    %v29 = vld [vmem:[%s0 + $0x10] sm:$0xff]
    %v30 = vld [vmem:[%s0 + $0x18] sm:$0xff]
    %v31 = vmul.f32 %v27, %v19
    %v32 = vmul.f32 %v28, %v20
    %v33 = vmul.f32 %v29, %v21
    %v34 = vmul.f32 %v30, %v22
    %v35 = vld [vmem:[%s1] sm:$0xff]
    %v36 = vld [vmem:[%s1 + $0x8] sm:$0xff]
    %v37 = vld [vmem:[%s1 + $0x10] sm:$0xff]
    %v38 = vld [vmem:[%s1 + $0x18] sm:$0xff]
    %v39 = vmul.f32 %v35, %v23
    %v40 = vmul.f32 %v36, %v24
    %v41 = vmul.f32 %v37, %v25
    %v42 = vmul.f32 %v38, %v26
    %v43 = vadd.f32 %v31, %v39
    %v44 = vadd.f32 %v32, %v40
    %v45 = vadd.f32 %v33, %v41
    %v46 = vadd.f32 %v34, %v42
    %v47 = vadd.f32 %v43, %v44
    %v48 = vadd.f32 %v47, %v45
    %v49 = vadd.f32 %v48, %v46
    %v50 = vrot.slane %v49, 4
    %v51 = vadd.f32 %v49, %v50
    %v52 = vrot.slane %v51, 2
    %v53 = vadd.f32 %v51, %v52
    %v54 = vrot.slane %v53, 1
    %v55 = vadd.f32 %v53, %v54
    %56 = vadd.xlane.f32.xlu0 %v55
    %v57 = vpop.xlane.xlu0 %56
    %s58 = sld [smem:[#allocation2]]
    %v59 = vstv %s58
    %v60 = vadd.f32 %v57, %v59
    %v61 = vxor.u32 %v60, 2147483648
    %v62 = vmul.f32 %v61, 1.442695
    %v63 = vpow.pop %v62
    %v64 = vadd.f32 %v63, 1.0
    %v65 = vrcp.pop %v64
    %v66 = vmul.f32 1.0, %v65
    %vm67 = vcmask 0
    %68 = vst.msk [vmem:[#allocation3] sm:$0x1] %vm67, %v66
    // Predicated region
    $region18: #{simple_nn_forward.1} parent=1 // pred_check
      _
    $region19: #{simple_nn_forward.1} parent=1 // pred_check_branch
      %70 = sbr.rel (0) target = $region21
    $region20: #{simple_nn_forward.1} parent=1 // pred_region
      %s72 = ssub.s32 16, 16
      %73 = vsyncadd [#allocation4], %s72
      %s75 = sshll.u32 [#allocation3], 4
      %s76 = int_to_ptr.vmem [resolvable:$true] %s75
      %78 = dma.vmem_to_hbm [thread:$0]  %s76, 16, %s4, [#allocation4]
    $region21: #{simple_nn_forward.1} parent=1 // pred_fallthru
      _
    // Predicated region
    $region22: #{simple_nn_forward.1} parent=1 // pred_check
      _
    $region23: #{simple_nn_forward.1} parent=1 // pred_check_branch
      %80 = sbr.rel (0) target = $region25
    $region24: #{simple_nn_forward.1} parent=1 // pred_region
      %81 = dma.done [#allocation4], 16
    $region25: #{simple_nn_forward.1} parent=1 // pred_fallthru
      _
    %82 = vsyncpa [#allocation4], 1

</llo_original>
